<compile_context>
chip_gen: v5e
topology: v5e:2x2
jax: 0.10.0
libtpu: 0.0.40
codegen_flags: <defaults>
</compile_context>

<pallas_src>
import math
import functools

import jax
import jax.numpy as jnp
from jax import lax
from jax.experimental import pallas as pl
from jax.experimental.pallas import tpu as pltpu


def _round_up(x, m):
    return ((x + m - 1) // m) * m


def _cdiv(a, b):
    return (a + b - 1) // b


def _vmem_capacity_bytes():
    try:
        info = pltpu.get_tpu_info()
        cap = getattr(info, "vmem_capacity_bytes", None)
        if cap:
            return int(cap)
    except Exception:
        pass
    return 64 * 1024 * 1024  # conservative fallback (v7x per-TC)


def _vmem_bytes(tm, tn, in_dim, rank, elem, has_bias):
    """Honest per-step VMEM estimate: double-buffered I/O + scratch + temps."""
    use = 2 * tm * in_dim * elem            # x tile (double-buffered)
    use += 2 * tn * in_dim * elem           # W tile
    use += 2 * in_dim * rank * elem         # A
    use += 2 * rank * tn * elem             # B
    if has_bias:
        use += 2 * tn * elem                # bias
    use += 2 * tm * tn * elem               # output tile
    use += tm * rank * 4                    # persistent xa scratch (f32)
    use += tm * tn * 4                      # f32 accumulator temporary
    use += tm * in_dim * elem               # loaded x value
    return use


def _linear_lora_kernel(x_ref, w_ref, a_ref, b_ref, *rest, alpha, has_bias):
    if has_bias:
        bias_ref, o_ref, xa_ref = rest
    else:
        bias_ref = None
        o_ref, xa_ref = rest

    x = x_ref[...]

    # LoRA projection hoisted out of the j (out-column) axis: compute once per
    # row tile into a persistent f32 scratch; alpha is folded into the tiny
    # (tm, rank) intermediate, not the (tm, tn) output tile.
    @pl.when(pl.program_id(1) == 0)
    def _():
        xa_ref[...] = jnp.dot(
            x, a_ref[...], preferred_element_type=jnp.float32) * alpha

    # Dense base path. W is kept in its native [out_dim, in_dim] layout, so
    # contract x's last dim against W's last dim (MXU handles transposed RHS).
    acc = lax.dot_general(x, w_ref[...], (((1,), (1,)), ((), ())),
                          preferred_element_type=jnp.float32)

    # Low-rank expansion: (alpha * x @ A) @ B.
    acc = acc + jnp.dot(xa_ref[...].astype(b_ref.dtype), b_ref[...],
                        preferred_element_type=jnp.float32)

    if has_bias:
        acc = acc + bias_ref[...].astype(jnp.float32)

    o_ref[...] = acc.astype(o_ref.dtype)


def linear_with_lora_forward(x, weight, bias, A, B, alpha):
    """Computes x @ weight.T + bias + alpha * (x @ A @ B) with one Pallas kernel.

    weight: [out_dim, in_dim] (PyTorch nn.Linear layout), bias: [out_dim] or None.
    A: [in_dim, rank], B: [rank, out_dim].
    """
    out_dim, in_dim = weight.shape
    rank = A.shape[1]
    assert A.shape == (in_dim, rank)
    assert B.shape == (rank, out_dim)
    assert x.shape[-1] == in_dim

    lead_shape = x.shape[:-1]
    x2d = x.reshape(-1, in_dim)
    M = x2d.shape[0]

    dtype = x.dtype
    elem = jnp.dtype(dtype).itemsize
    has_bias = bias is not None

    w_nat = weight.astype(dtype)                 # [out_dim, in_dim], no transpose
    a_mat = A.astype(dtype)
    b_mat = B.astype(dtype)
    bias2d = bias.reshape(1, out_dim).astype(dtype) if has_bias else None

    # ---- generation-aware VMEM budget ----
    vmem_cap = _vmem_capacity_bytes()
    vmem_budget = int(vmem_cap * 0.70)           # counted buffers
    vmem_limit = int(vmem_cap * 0.85)            # compiler limit (headroom left)

    # ---- out-column tile (lane-dense, minimal padding) ----
    if out_dim <= 512:
        tn_candidates = [_round_up(out_dim, 128)]
    else:
        cands = [512, 384, 256, 128]
        cands.sort(key=lambda t: (_round_up(out_dim, t) - out_dim, -t))
        tn_candidates = cands

    # ---- row tile: largest even split of M (multiple of 8) that fits VMEM ----
    m8 = _round_up(max(M, 1), 8)
    tm = tn = None
    for tn_c in tn_candidates:
        for cand in (2048, 1536, 1024, 768, 512, 384, 256, 128, 64, 32, 16, 8):
            nt = _cdiv(m8, cand)
            tm_c = _round_up(_cdiv(m8, nt), 8)
            if _vmem_bytes(tm_c, tn_c, in_dim, rank, elem, has_bias) <= vmem_budget:
                tm, tn = tm_c, tn_c
                break
        if tm is not None:
            break
    if tm is None:
        tm, tn = 8, 128   # last resort; relies on vmem_limit headroom

    n_pad = _round_up(out_dim, tn)
    if n_pad != out_dim:
        padn = n_pad - out_dim
        w_nat = jnp.pad(w_nat, ((0, padn), (0, 0)))
        b_mat = jnp.pad(b_mat, ((0, 0), (0, padn)))
        if has_bias:
            bias2d = jnp.pad(bias2d, ((0, 0), (0, padn)))

    m_pad = _round_up(M, tm)
    if m_pad != M:
        x2d = jnp.pad(x2d, ((0, m_pad - M), (0, 0)))

    grid = (m_pad // tm, n_pad // tn)
    num_i, num_j = grid

    # ---- honest cost estimate (streaming pattern, not single-touch sizes) ----
    flops = int(2 * m_pad * in_dim * n_pad            # dense base
                + 2 * m_pad * in_dim * rank            # x @ A (once per row tile)
                + 2 * m_pad * rank * n_pad)            # (xA) @ B
    bytes_accessed = int(
        x2d.size * elem                                # x read once (const in j)
        + w_nat.size * elem * num_i                    # W re-streamed per row tile
        + b_mat.size * elem * num_i
        + (bias2d.size * elem * num_i if has_bias else 0)
        + a_mat.size * elem                            # A resident
        + m_pad * n_pad * elem)                        # output written once

    in_specs = [
        pl.BlockSpec((tm, in_dim), lambda i, j: (i, 0)),     # x row tile
        pl.BlockSpec((tn, in_dim), lambda i, j: (j, 0)),     # W native layout
        pl.BlockSpec((in_dim, rank), lambda i, j: (0, 0)),   # A (resident)
        pl.BlockSpec((rank, tn), lambda i, j: (0, j)),       # B column tile
    ]
    operands = [x2d, w_nat, a_mat, b_mat]
    if has_bias:
        in_specs.append(pl.BlockSpec((1, tn), lambda i, j: (0, j)))
        operands.append(bias2d)

    kernel = functools.partial(_linear_lora_kernel, alpha=float(alpha),
                               has_bias=has_bias)

    out2d = pl.pallas_call(
        kernel,
        out_shape=jax.ShapeDtypeStruct((m_pad, n_pad), dtype),
        grid_spec=pltpu.PrefetchScalarGridSpec(
            num_scalar_prefetch=0,
            grid=grid,
            in_specs=in_specs,
            out_specs=pl.BlockSpec((tm, tn), lambda i, j: (i, j)),
            scratch_shapes=[pltpu.VMEM((tm, rank), jnp.float32)],
        ),
        compiler_params=pltpu.CompilerParams(
            # i (row tiles) is independent -> megacore parallel; j carries the
            # persistent x@A scratch, so it must stay sequential.
            dimension_semantics=("parallel", "arbitrary"),
            vmem_limit_bytes=vmem_limit,
        ),
        cost_estimate=pl.CostEstimate(
            flops=flops, transcendentals=0, bytes_accessed=bytes_accessed),
    )(*operands)

    out2d = out2d[:M, :out_dim]
    return out2d.reshape(*lead_shape, out_dim)


def make_lora_params(key, in_dim, out_dim, rank):
    """Mirrors LoRALayer.__init__:
       A ~ kaiming_uniform_(a=sqrt(5)) => U(-1/sqrt(fan_in), 1/sqrt(fan_in)),
         PyTorch fan_in for a (in_dim, rank) tensor is rank.
       B = zeros(rank, out_dim).
    """
    bound = 1.0 / math.sqrt(rank)
    A = jax.random.uniform(key, (in_dim, rank), jnp.float32,
                           minval=-bound, maxval=bound)
    B = jnp.zeros((rank, out_dim), jnp.float32)
    return A, B


def make_linear_params(key, in_dim, out_dim):
    """Mirrors torch.nn.Linear default init (U(-1/sqrt(in), 1/sqrt(in)))."""
    k_w, k_b = jax.random.split(key)
    bound = 1.0 / math.sqrt(in_dim)
    W = jax.random.uniform(k_w, (out_dim, in_dim), jnp.float32,
                           minval=-bound, maxval=bound)
    b = jax.random.uniform(k_b, (out_dim,), jnp.float32,
                           minval=-bound, maxval=bound)
    return W, b


def _ref_forward(x, W, bias, A, B, alpha):
    hp = jax.lax.Precision.HIGHEST
    base = jnp.einsum("...i,oi->...o", x, W, precision=hp)
    if bias is not None:
        base = base + bias
    xa = jnp.einsum("...i,ir->...r", x, A, precision=hp)
    lora = jnp.einsum("...r,ro->...o", xa, B, precision=hp)
    return base + alpha * lora


if __name__ == "__main__":
    key = jax.random.PRNGKey(0)
    k_x, k_lin, k_a, k_bnz, k_x2, k_lin2, k_a2, k_b2 = jax.random.split(key, 8)

    # --- small-shape check (typical module usage) ---
    batch, seq, in_dim, out_dim, rank = 2, 8, 32, 64, 8
    alpha = 4.0

    x = jax.random.normal(k_x, (batch, seq, in_dim), jnp.float32)
    W, bias = make_linear_params(k_lin, in_dim, out_dim)
    A, B = make_lora_params(k_a, in_dim, out_dim, rank)

    # Faithful forward (B initialized to zeros, so the LoRA term is 0).
    out = jax.block_until_ready(linear_with_lora_forward(x, W, bias, A, B, alpha))
    ref = _ref_forward(x, W, bias, A, B, alpha)
    assert out.shape == (batch, seq, out_dim)
    assert jnp.allclose(out, ref, atol=1e-4, rtol=1e-4)

    # Non-zero B exercises the low-rank matmul path.
    B_nz = jax.random.normal(k_bnz, (rank, out_dim), jnp.float32) * 0.1
    out_nz = jax.block_until_ready(linear_with_lora_forward(x, W, bias, A, B_nz, alpha))
    ref_nz = _ref_forward(x, W, bias, A, B_nz, alpha)
    assert jnp.allclose(out_nz, ref_nz, atol=1e-4, rtol=1e-4)

    # --- larger ragged-shape check: exercises M padding, tn selection /
    #     out_dim padding, the x@A hoist across several j tiles, no-bias path ---
    M2, in2, out2, rank2 = 1050, 256, 1152, 16
    x2 = jax.random.normal(k_x2, (M2, in2), jnp.float32)
    W2, _ = make_linear_params(k_lin2, in2, out2)
    A2 = jax.random.uniform(k_a2, (in2, rank2), jnp.float32,
                            minval=-0.25, maxval=0.25)
    B2 = jax.random.normal(k_b2, (rank2, out2), jnp.float32) * 0.05
    out_big = jax.block_until_ready(
        linear_with_lora_forward(x2, W2, None, A2, B2, 2.0))
    ref_big = _ref_forward(x2, W2, None, A2, B2, 2.0)
    assert out_big.shape == (M2, out2)
    assert jnp.allclose(out_big, ref_big, atol=2e-3, rtol=2e-3)

    print("KERNEL_OK")
</pallas_src>

<mosaic_0001>
module attributes {stable_mosaic.version = 11 : i64} {
  func.func @_linear_lora_kernel(%arg0: i32, %arg1: i32, %arg2: memref<16x32xf32, #tpu.memory_space<vmem>>, %arg3: memref<128x32xf32, #tpu.memory_space<vmem>>, %arg4: memref<32x8xf32, #tpu.memory_space<vmem>>, %arg5: memref<8x128xf32, #tpu.memory_space<vmem>>, %arg6: memref<1x128xf32, #tpu.memory_space<vmem>>, %arg7: memref<16x128xf32, #tpu.memory_space<vmem>>, %arg8: memref<16x8xf32, #tpu.memory_space<vmem>>) attributes {dimension_semantics = [#tpu.dimension_semantics<parallel>, #tpu.dimension_semantics<arbitrary>], iteration_bounds = array<i64: 1, 1>, scalar_prefetch = 0 : i64, scratch_operands = 1 : i64, tpu.core_type = #tpu.core_type<tc>, window_params = [{transform_indices = @transform_0, window_bounds = array<i64: 16, 32>}, {transform_indices = @transform_1, window_bounds = array<i64: 128, 32>}, {pipeline_mode = #tpu.pipeline_mode<synchronous>, transform_indices = @transform_2, window_bounds = array<i64: 32, 8>}, {transform_indices = @transform_3, window_bounds = array<i64: 8, 128>}, {transform_indices = @transform_4, window_bounds = array<i64: 1, 128>}, {transform_indices = @transform_5, window_bounds = array<i64: 16, 128>}]} {
    %c0 = arith.constant 0 : index
    %c0_0 = arith.constant 0 : index
    %0 = vector.load %arg2[%c0, %c0_0] : memref<16x32xf32, #tpu.memory_space<vmem>>, vector<16x32xf32>
    %c0_i32 = arith.constant 0 : i32
    %1 = arith.cmpi eq, %arg1, %c0_i32 : i32
    %2 = arith.extui %1 : i1 to i32
    %c0_i32_1 = arith.constant 0 : i32
    %3 = arith.cmpi ne, %2, %c0_i32_1 : i32
    scf.if %3 {
      %c0_13 = arith.constant 0 : index
      %c0_14 = arith.constant 0 : index
      %14 = vector.load %arg4[%c0_13, %c0_14] : memref<32x8xf32, #tpu.memory_space<vmem>>, vector<32x8xf32>
      %cst_15 = arith.constant dense<0.000000e+00> : vector<16x8xf32>
      %15 = tpu.matmul %0, %14, %cst_15 {dimension_numbers = #tpu.dot_dimension_numbers<[1], [0], [0], [1], [0, 0, 1, 1], [], []>} : vector<16x32xf32>, vector<32x8xf32>, vector<16x8xf32> -> vector<16x8xf32>
      %cst_16 = arith.constant 4.000000e+00 : f32
      %16 = vector.broadcast %cst_16 : f32 to vector<16x8xf32>
      %17 = arith.mulf %15, %16 : vector<16x8xf32>
      %c0_17 = arith.constant 0 : index
      %c0_18 = arith.constant 0 : index
      %18 = vector.load %arg8[%c0_17, %c0_18] : memref<16x8xf32, #tpu.memory_space<vmem>>, vector<16x8xf32>
      tpu.vector_store %arg8[%c0_17, %c0_18], %17 {strides = array<i32>} : memref<16x8xf32, #tpu.memory_space<vmem>>, vector<16x8xf32>,
    } else {
    }
    %c0_2 = arith.constant 0 : index
    %c0_3 = arith.constant 0 : index
    %4 = vector.load %arg3[%c0_2, %c0_3] : memref<128x32xf32, #tpu.memory_space<vmem>>, vector<128x32xf32>
    %cst = arith.constant dense<0.000000e+00> : vector<16x128xf32>
    %5 = tpu.matmul %0, %4, %cst {dimension_numbers = #tpu.dot_dimension_numbers<[1], [1], [0], [0], [0, 0, 1, 0], [], []>} : vector<16x32xf32>, vector<128x32xf32>, vector<16x128xf32> -> vector<16x128xf32>
    %c0_4 = arith.constant 0 : index
    %c0_5 = arith.constant 0 : index
    %6 = vector.load %arg8[%c0_4, %c0_5] : memref<16x8xf32, #tpu.memory_space<vmem>>, vector<16x8xf32>
    %c0_6 = arith.constant 0 : index
    %c0_7 = arith.constant 0 : index
    %7 = vector.load %arg5[%c0_6, %c0_7] : memref<8x128xf32, #tpu.memory_space<vmem>>, vector<8x128xf32>
    %cst_8 = arith.constant dense<0.000000e+00> : vector<16x128xf32>
    %8 = tpu.matmul %6, %7, %cst_8 {dimension_numbers = #tpu.dot_dimension_numbers<[1], [0], [0], [1], [0, 0, 1, 1], [], []>} : vector<16x8xf32>, vector<8x128xf32>, vector<16x128xf32> -> vector<16x128xf32>
    %9 = arith.addf %5, %8 : vector<16x128xf32>
    %c0_9 = arith.constant 0 : index
    %c0_10 = arith.constant 0 : index
    %10 = vector.load %arg6[%c0_9, %c0_10] : memref<1x128xf32, #tpu.memory_space<vmem>>, vector<1x128xf32>
    %11 = vector.broadcast %10 : vector<1x128xf32> to vector<16x128xf32>
    %12 = arith.addf %9, %11 : vector<16x128xf32>
    %c0_11 = arith.constant 0 : index
    %c0_12 = arith.constant 0 : index
    %13 = vector.load %arg7[%c0_11, %c0_12] : memref<16x128xf32, #tpu.memory_space<vmem>>, vector<16x128xf32>
    tpu.vector_store %arg7[%c0_11, %c0_12], %12 {strides = array<i32>} : memref<16x128xf32, #tpu.memory_space<vmem>>, vector<16x128xf32>,
    return
  }
  func.func @transform_0(%arg0: i32, %arg1: i32) -> (i32, i32) {
    %c0_i32 = arith.constant 0 : i32
    %c0_i32_0 = arith.constant 0 : i32
    return %arg0, %c0_i32 : i32, i32
  }
  func.func @transform_1(%arg0: i32, %arg1: i32) -> (i32, i32) {
    %c0_i32 = arith.constant 0 : i32
    %c0_i32_0 = arith.constant 0 : i32
    return %arg1, %c0_i32 : i32, i32
  }
  func.func @transform_2(%arg0: i32, %arg1: i32) -> (i32, i32) {
    %c0_i32 = arith.constant 0 : i32
    %c0_i32_0 = arith.constant 0 : i32
    %c0_i32_1 = arith.constant 0 : i32
    return %c0_i32, %c0_i32_0 : i32, i32
  }
  func.func @transform_3(%arg0: i32, %arg1: i32) -> (i32, i32) {
    %c0_i32 = arith.constant 0 : i32
    %c0_i32_0 = arith.constant 0 : i32
    return %c0_i32, %arg1 : i32, i32
  }
  func.func @transform_4(%arg0: i32, %arg1: i32) -> (i32, i32) {
    %c0_i32 = arith.constant 0 : i32
    %c0_i32_0 = arith.constant 0 : i32
    return %c0_i32, %arg1 : i32, i32
  }
  func.func @transform_5(%arg0: i32, %arg1: i32) -> (i32, i32) {
    %c0_i32 = arith.constant 0 : i32
    return %arg0, %arg1 : i32, i32
  }
}

</mosaic_0001>

<llo_original>
// kernel: tpu_custom_call.1
$region0: #{tpu_custom_call.1}
  #allocation0 [shape = 'u32[]', space=smem, size = 0x4, offset = 0x4, fixed_abs, tag = 'smem constant byte address 0x4 - core index']
  #allocation1 [shape = 'u32[72,128]{1,0:T(1,128)}', space=vmem, size = 0x9000, scoped, tag = 'internal scratch']
  #allocation2 [shape = 'f32[16,8]{1,0:T(8,128)}', space=vmem, size = 0x2000, scoped, tag = 'scratch operand']
  %s0 = inlined_call_operand.vmem [shape: f32[16,32], index: 0, kind: input, shape index: {}]
  %s1 = inlined_call_operand.vmem [shape: f32[128,32], index: 1, kind: input, shape index: {}]
  %s2 = inlined_call_operand.vmem [shape: f32[32,8], index: 2, kind: input, shape index: {}]
  %s3 = inlined_call_operand.vmem [shape: f32[8,128], index: 3, kind: input, shape index: {}]
  %s4 = inlined_call_operand.vmem [shape: f32[1,128], index: 4, kind: input, shape index: {}]
  %s5 = inlined_call_operand.hbm [shape: f32[16,128], index: 5, kind: output, shape index: {}]
  %s6 = sld [smem:[#allocation0]]
  $region34: #{tpu_custom_call.1} parent=0
    _
  %s8 = ssub.s32 1, %s6
  %s9 = scalar_select 0, %s8, %s6
  $region1: #{tpu_custom_call.1} parent=0
    #allocation3 [shape = 'u8[8192]{0}', space=vmem, size = 0x2000, scoped, tag = 'output window, operand 0, single buffered']
    #allocation4 [shape = 's32[1]{0}', space=sflag, size = 0x4, scoped, tag = 'scoped memory for tpu_custom_call.1']
    %10 = vsyncpa [#allocation4], 0
    // Predicated region
    $region2: #{tpu_custom_call.1} parent=1 // pred_check
      _
    $region3: #{tpu_custom_call.1} parent=1 // pred_check_branch
      %12 = sbr.rel (0) target = $region5
    $region4: #{tpu_custom_call.1} parent=1 // pred_region
      _
    $region5: #{tpu_custom_call.1} parent=1 // pred_fallthru
      _
    // Predicated region
    $region6: #{tpu_custom_call.1} parent=1 // pred_check
      _
    $region7: #{tpu_custom_call.1} parent=1 // pred_check_branch
      %14 = sbr.rel (0) target = $region9
    $region8: #{tpu_custom_call.1} parent=1 // pred_region
      _
    $region9: #{tpu_custom_call.1} parent=1 // pred_fallthru
      _
    // Predicated region
    $region10: #{tpu_custom_call.1} parent=1 // pred_check
      _
    $region11: #{tpu_custom_call.1} parent=1 // pred_check_branch
      %16 = sbr.rel (0) target = $region13
    $region12: #{tpu_custom_call.1} parent=1 // pred_region
      _
    $region13: #{tpu_custom_call.1} parent=1 // pred_fallthru
      _
    // Predicated region
    $region14: #{tpu_custom_call.1} parent=1 // pred_check
      _
    $region15: #{tpu_custom_call.1} parent=1 // pred_check_branch
      %18 = sbr.rel (0) target = $region17
    $region16: #{tpu_custom_call.1} parent=1 // pred_region
      _
    $region17: #{tpu_custom_call.1} parent=1 // pred_fallthru
      _
    // Predicated region
    $region18: #{tpu_custom_call.1} parent=1 // pred_check
      _
    $region19: #{tpu_custom_call.1} parent=1 // pred_check_branch
      %20 = sbr.rel (0) target = $region21
    $region20: #{tpu_custom_call.1} parent=1 // pred_region
      _
    $region21: #{tpu_custom_call.1} parent=1 // pred_fallthru
      _
    %v21 = vld [vmem:[%s0] sm:$0xff]
    %v22 = vld [vmem:[%s0 + $0x8] sm:$0xff]
    %p23 = scmp.eq.s32.totalorder 0, 0
    // Predicated region
    $region22: #{tpu_custom_call.1} parent=1 // pred_check
      %p24 = pneg %p23
    $region23: #{tpu_custom_call.1} parent=1 // pred_check_branch
      %26 = sbr.rel (%p24) target = $region25
    $region24: #{tpu_custom_call.1} parent=1 // pred_region
      %v27 = vld [vmem:[%s2] sm:$0xff]
      %v28 = vld [vmem:[%s2 + $0x8] sm:$0xff]
      %v29 = vld [vmem:[%s2 + $0x10] sm:$0xff]
      %v30 = vld [vmem:[%s2 + $0x18] sm:$0xff]
      %vm31 = vcmask 261120
      %v33 = vsel %vm31, %v21, 0
      %v36 = vsel %vm31, %v22, 0
      %38 = vmatpush.msra.mxu0 0.0
      %39 = vmatpush.msra.mxu0 0.0
      %40 = vmatpush.msra.mxu0 0.0
      %41 = vmatpush.msra.mxu0 0.0
      %42 = vmatpush.msra.mxu0 0.0
      %43 = vmatpush.msra.mxu0 0.0
      %44 = vmatpush.msra.mxu0 0.0
      %45 = vmatpush.msra.mxu0 0.0
      %46 = vmatpush.msra.mxu0 0.0
      %47 = vmatpush.msra.mxu0 0.0
      %48 = vmatpush.msra.mxu0 0.0
      %49 = vmatpush.msra.mxu0 0.0
      %50 = vmatpush.msra.mxu0 %v30
      %51 = vmatpush.msra.mxu0 %v29
      %52 = vmatpush.msra.mxu0 %v28
      %53 = vmatpush.msra.mxu0 %v27
      %54 = vmatmul.f32.gmra.mxu0 %v33
      %v55 = vpop.f32.mrf.mxu0
      %v56 = vadd.f32 0.0, %v55
      %57 = vmatmul.f32.gmra.mxu0 %v36
      %v58 = vpop.f32.mrf.mxu0
      %v59 = vadd.f32 0.0, %v58
      %60 = vdwg.mxu0
      %v61 = vmul.f32 %v56, 4.0
      %v62 = vmul.f32 %v59, 4.0
      %vm63 = vcmask 64512
      %64 = vst.msk [vmem:[#allocation2] sm:$0xff] %vm63, %v61
      %65 = vst.msk [vmem:[#allocation2 + $0x8] sm:$0xff] %vm63, %v62
    $region25: #{tpu_custom_call.1} parent=1 // pred_fallthru
      _
    %v66 = vld [vmem:[%s1] sm:$0xff]
    %v67 = vld [vmem:[%s1 + $0x8] sm:$0xff]
    %v68 = vld [vmem:[%s1 + $0x10] sm:$0xff]
    %v69 = vld [vmem:[%s1 + $0x18] sm:$0xff]
    %v70 = vld [vmem:[%s1 + $0x20] sm:$0xff]
    %v71 = vld [vmem:[%s1 + $0x28] sm:$0xff]
    %v72 = vld [vmem:[%s1 + $0x30] sm:$0xff]
    %v73 = vld [vmem:[%s1 + $0x38] sm:$0xff]
    %v74 = vld [vmem:[%s1 + $0x40] sm:$0xff]
    %v75 = vld [vmem:[%s1 + $0x48] sm:$0xff]
    %v76 = vld [vmem:[%s1 + $0x50] sm:$0xff]
    %v77 = vld [vmem:[%s1 + $0x58] sm:$0xff]
    %v78 = vld [vmem:[%s1 + $0x60] sm:$0xff]
    %v79 = vld [vmem:[%s1 + $0x68] sm:$0xff]
    %v80 = vld [vmem:[%s1 + $0x70] sm:$0xff]
    %v81 = vld [vmem:[%s1 + $0x78] sm:$0xff]
    %v82 = vld [vmem:[#allocation2] sm:$0xff]
    %v83 = vld [vmem:[#allocation2 + $0x8] sm:$0xff]
    %v84 = vld [vmem:[%s3] sm:$0xff]
    %vm85 = vcmask 64512
    %v87 = vsel %vm85, %v82, 0
    %v90 = vsel %vm85, %v83, 0
    %92 = vmatpush.msra.mxu0 0.0
    %93 = vmatpush.msra.mxu0 0.0
    %94 = vmatpush.msra.mxu0 0.0
    %95 = vmatpush.msra.mxu0 0.0
    %96 = vmatpush.msra.mxu0 0.0
    %97 = vmatpush.msra.mxu0 0.0
    %98 = vmatpush.msra.mxu0 0.0
    %99 = vmatpush.msra.mxu0 0.0
    %100 = vmatpush.msra.mxu0 0.0
    %101 = vmatpush.msra.mxu0 0.0
    %102 = vmatpush.msra.mxu0 0.0
    %103 = vmatpush.msra.mxu0 0.0
    %104 = vmatpush.msra.mxu0 0.0
    %105 = vmatpush.msra.mxu0 0.0
    %106 = vmatpush.msra.mxu0 0.0
    %107 = vmatpush.msra.mxu0 %v84
    %108 = vmatmul.f32.gmra.mxu0 %v87
    %v109 = vpop.f32.mrf.mxu0
    %v110 = vadd.f32 0.0, %v109
    %111 = vmatmul.f32.gmra.mxu0 %v90
    %v112 = vpop.f32.mrf.mxu0
    %v113 = vadd.f32 0.0, %v112
    %114 = vdwg.mxu0
    %vm115 = vcmask 261120
    %v117 = vsel %vm115, %v21, 0
    %v120 = vsel %vm115, %v22, 0
    %v123 = vsel %vm115, %v66, 0
    %v126 = vsel %vm115, %v67, 0
    %v129 = vsel %vm115, %v68, 0
    %v132 = vsel %vm115, %v69, 0
    %v135 = vsel %vm115, %v70, 0
    %v138 = vsel %vm115, %v71, 0
    %v141 = vsel %vm115, %v72, 0
    %v144 = vsel %vm115, %v73, 0
    %v147 = vsel %vm115, %v74, 0
    %v150 = vsel %vm115, %v75, 0
    %v153 = vsel %vm115, %v76, 0
    %v156 = vsel %vm115, %v77, 0
    %v159 = vsel %vm115, %v78, 0
    %v162 = vsel %vm115, %v79, 0
    %v165 = vsel %vm115, %v80, 0
    %v168 = vsel %vm115, %v81, 0
    %170 = vmatpush.xpose.msra.mxu0 %v168
    %171 = vmatpush.xpose.msra.mxu0 %v165
    %172 = vmatpush.xpose.msra.mxu0 %v162
    %173 = vmatpush.xpose.msra.mxu0 %v159
    %174 = vmatpush.xpose.msra.mxu0 %v156
    %175 = vmatpush.xpose.msra.mxu0 %v153
    %176 = vmatpush.xpose.msra.mxu0 %v150
    %177 = vmatpush.xpose.msra.mxu0 %v147
    %178 = vmatpush.xpose.msra.mxu0 %v144
    %179 = vmatpush.xpose.msra.mxu0 %v141
    %180 = vmatpush.xpose.msra.mxu0 %v138
    %181 = vmatpush.xpose.msra.mxu0 %v135
    %182 = vmatpush.xpose.msra.mxu0 %v132
    %183 = vmatpush.xpose.msra.mxu0 %v129
    %184 = vmatpush.xpose.msra.mxu0 %v126
    %185 = vmatpush.xpose.msra.mxu0 %v123
    %186 = vmatmul.f32.gmra.mxu0 %v117
    %v187 = vpop.f32.mrf.mxu0
    %v188 = vadd.f32 %v110, %v187
    %189 = vmatmul.f32.gmra.mxu0 %v120
    %v190 = vpop.f32.mrf.mxu0
    %v191 = vadd.f32 %v113, %v190
    %192 = vdwg.mxu0
    %v193 = vld [vmem:[%s4] sm:$0x1]
    %v195 = vperm.slane %v193, 0
    %v197 = vadd.f32 %v188, %v195
    %v198 = vadd.f32 %v191, %v195
    %199 = vst [vmem:[#allocation3] sm:$0xff] %v197
    %200 = vst [vmem:[#allocation3 + $0x8] sm:$0xff] %v198
    // Predicated region
    $region26: #{tpu_custom_call.1} parent=1 // pred_check
      _
    $region27: #{tpu_custom_call.1} parent=1 // pred_check_branch
      %202 = sbr.rel (0) target = $region29
    $region28: #{tpu_custom_call.1} parent=1 // pred_region
      %204 = vsyncadd [#allocation4], 0
      %s205 = sshll.u32 [#allocation3], 4
      %s206 = int_to_ptr.vmem [resolvable:$true] %s205
      %s207 = sshll.u32 %s5, 4
      %s208 = int_to_ptr.hbm [resolvable:$true] %s207
      %213 = dma.vmem_to_hbm [thread:$0]  %s206, 256, %s208, [#allocation4], 128, 128, 8
    $region29: #{tpu_custom_call.1} parent=1 // pred_fallthru
      _
    // Predicated region
    $region30: #{tpu_custom_call.1} parent=1 // pred_check
      _
    $region31: #{tpu_custom_call.1} parent=1 // pred_check_branch
      %215 = sbr.rel (0) target = $region33
    $region32: #{tpu_custom_call.1} parent=1 // pred_region
      %217 = dma.done [#allocation4], 256
    $region33: #{tpu_custom_call.1} parent=1 // pred_fallthru
      _
    %218 = vsyncpa [#allocation4], 1

</llo_original>
